<compile_context>
chip_gen: v7x
topology: tpu7x:2x2x1
jax: 0.10.0
libtpu: 0.0.40
codegen_flags: <defaults>
</compile_context>

<pallas_src>
import functools

import jax
import jax.numpy as jnp
from jax.experimental import pallas as pl
from jax.experimental.pallas import tpu as pltpu


def _round_up(x, m):
    return ((x + m - 1) // m) * m


def _nw_kernel(c_ref, q_ref, k_ref, v_ref, o_ref, *attn_refs, m_valid, m_pad):
    # c_ref: SMEM (1,) f32 holding -0.5*w*w
    # q_ref: (TN,1) ; k_ref/v_ref: (TN, Mp) ; o_ref: (TN,1) ; optional attn_ref: (TN, Mp)
    c = c_ref[0]
    diff = q_ref[...] - k_ref[...]                 # broadcast (TN,1)-(TN,Mp) -> (TN,Mp)
    scores = c * diff * diff                       # -((q-k)*w)**2 / 2

    if m_valid != m_pad:
        # Exclude padded key lanes from the softmax.
        lane = jax.lax.broadcasted_iota(jnp.int32, scores.shape, 1)
        scores = jnp.where(lane < m_valid, scores, jnp.float32(-1e30))

    # Numerically-stable softmax along the lane (M) axis.
    m = jnp.max(scores, axis=1, keepdims=True)
    e = jnp.exp(scores - m)                        # EUP
    denom = jnp.sum(e, axis=1, keepdims=True)
    inv = pl.reciprocal(denom, approx=True)        # EUP
    inv = inv * (2.0 - denom * inv)                # one Newton step on (TN,1) -> full precision

    # Normalize only the (TN,1) reduced sum for the output (no extra (TN,Mp)-wide pass).
    o_ref[...] = jnp.sum(e * v_ref[...], axis=1, keepdims=True) * inv

    if attn_refs:
        attn_refs[0][...] = e * inv


@functools.partial(jax.jit, static_argnames=("with_attention", "tn_max"))
def nw_kernel_regression(w, queries, keys, values, *, with_attention=True, tn_max=256):
    """w: (1,) f32; queries: (N,); keys/values: (N, M).

    Returns (out (N,), attn (N, M)) if with_attention else out (N,).
    """
    n, m = keys.shape
    f32 = jnp.float32

    # Lane-dense M: pad to a multiple of 128.
    m_pad = max(128, _round_up(m, 128))

    # Row tile size: big enough to amortize per-step overhead (~0.35us/step), small enough
    # that the double-buffered (TN, Mp) f32 tiles + temporaries stay well inside v7x VMEM.
    vmem_budget = 40 * (2 ** 20)
    tn_cap = max(8, ((vmem_budget // (8 * m_pad * 4)) // 8) * 8)
    tn = min(tn_max, tn_cap, _round_up(n, 8))
    tn = max(8, (tn // 8) * 8)
    n_pad = _round_up(n, tn)

    # Pad inputs (padded rows/lanes are masked or sliced away).
    q2 = jnp.zeros((n_pad, 1), f32).at[:n, 0].set(queries.astype(f32))
    kp = jnp.zeros((n_pad, m_pad), f32).at[:n, :m].set(keys.astype(f32))
    vp = jnp.zeros((n_pad, m_pad), f32).at[:n, :m].set(values.astype(f32))

    # Fold the scalar once: scores = c * (q-k)^2 with c = -0.5*w^2.
    wf = w.astype(f32).reshape(-1)
    c = (-0.5 * wf * wf).reshape((1,))

    grid = (n_pad // tn,)
    in_specs = [
        pl.BlockSpec(memory_space=pltpu.SMEM),             # c scalar
        pl.BlockSpec((tn, 1), lambda i: (i, 0)),           # queries
        pl.BlockSpec((tn, m_pad), lambda i: (i, 0)),       # keys
        pl.BlockSpec((tn, m_pad), lambda i: (i, 0)),       # values
    ]
    out_shapes = [jax.ShapeDtypeStruct((n_pad, 1), f32)]
    out_specs = [pl.BlockSpec((tn, 1), lambda i: (i, 0))]
    if with_attention:
        out_shapes.append(jax.ShapeDtypeStruct((n_pad, m_pad), f32))
        out_specs.append(pl.BlockSpec((tn, m_pad), lambda i: (i, 0)))

    # Explicit VMEM limit: double-buffered keys/values (+attn) tiles plus headroom,
    # clamped to stay safe on v7x (64 MiB total VMEM per TC).
    tile_bytes = tn * m_pad * 4
    n_big = 2 + (1 if with_attention else 0)
    vmem_limit = int(min(48 * (2 ** 20), max(16 * (2 ** 20), 3 * 2 * n_big * tile_bytes)))

    kernel = functools.partial(_nw_kernel, m_valid=m, m_pad=m_pad)
    outs = pl.pallas_call(
        kernel,
        grid=grid,
        out_shape=tuple(out_shapes),
        in_specs=in_specs,
        out_specs=tuple(out_specs),
        compiler_params=pltpu.CompilerParams(
            dimension_semantics=("parallel",),   # row tiles shard across v7x's 2 TCs
            vmem_limit_bytes=vmem_limit,
        ),
    )(c, q2, kp, vp)

    out = outs[0][:n, 0]
    if with_attention:
        return out, outs[1][:n, :m]
    return out


def _f(x):
    return 2.0 * jnp.sin(x) + x ** 0.8


if __name__ == "__main__":
    key = jax.random.PRNGKey(0)
    k_w, k_xtr, k_noise = jax.random.split(key, 3)

    # Shapes match the original script: n_train = 50, x_test = arange(0, 5, 0.1).
    n_train = 50
    x_train = jnp.sort(jax.random.uniform(k_xtr, (n_train,), jnp.float32) * 5.0)
    y_train = _f(x_train) + 0.5 * jax.random.normal(k_noise, (n_train,), jnp.float32)
    x_test = jnp.arange(0.0, 5.0, 0.1, dtype=jnp.float32)
    n_test = x_test.shape[0]

    # keys/values = train data broadcast to every test query (torch .repeat((n_test, 1)))
    keys = jnp.tile(x_train[None, :], (n_test, 1))         # (N, M)
    values = jnp.tile(y_train[None, :], (n_test, 1))       # (N, M)

    # Deterministic parameter init (torch.rand((1,)) analogue).
    w = jax.random.uniform(k_w, (1,), jnp.float32)

    out, attn = nw_kernel_regression(w, x_test, keys, values, with_attention=True)
    out = jax.block_until_ready(out)
    attn = jax.block_until_ready(attn)

    # Output-only path (drops the attn HBM writeback).
    out_only = jax.block_until_ready(
        nw_kernel_regression(w, x_test, keys, values, with_attention=False)
    )

    # Pure-JAX reference for correctness.
    q_rep = jnp.tile(x_test[:, None], (1, n_train))
    scores_ref = -((q_rep - keys) * w[0]) ** 2 / 2.0
    attn_ref = jax.nn.softmax(scores_ref, axis=1)
    out_ref = jnp.sum(attn_ref * values, axis=1)

    assert out.shape == (n_test,)
    assert attn.shape == (n_test, n_train)
    assert jnp.allclose(out, out_ref, atol=1e-4, rtol=1e-4)
    assert jnp.allclose(attn, attn_ref, atol=1e-4, rtol=1e-4)
    assert jnp.allclose(out_only, out_ref, atol=1e-4, rtol=1e-4)

    print("KERNEL_OK")
</pallas_src>

<mosaic_0001>
module attributes {stable_mosaic.version = 11 : i64} {
  func.func @_nw_kernel(%arg0: i32, %arg1: memref<1xf32, #tpu.memory_space<smem>>, %arg2: memref<56x1xf32, #tpu.memory_space<vmem>>, %arg3: memref<56x128xf32, #tpu.memory_space<vmem>>, %arg4: memref<56x128xf32, #tpu.memory_space<vmem>>, %arg5: memref<56x1xf32, #tpu.memory_space<vmem>>, %arg6: memref<56x128xf32, #tpu.memory_space<vmem>>) attributes {dimension_semantics = [#tpu.dimension_semantics<parallel>], iteration_bounds = array<i64: 1>, scalar_prefetch = 0 : i64, scratch_operands = 0 : i64, tpu.core_type = #tpu.core_type<tc>, window_params = [{transform_indices = @transform_0, window_bounds = array<i64: 1>}, {transform_indices = @transform_1, window_bounds = array<i64: 56, 1>}, {transform_indices = @transform_2, window_bounds = array<i64: 56, 128>}, {transform_indices = @transform_3, window_bounds = array<i64: 56, 128>}, {transform_indices = @transform_4, window_bounds = array<i64: 56, 1>}, {transform_indices = @transform_5, window_bounds = array<i64: 56, 128>}]} {
    %c0 = arith.constant 0 : index
    %0 = memref.load %arg1[%c0] : memref<1xf32, #tpu.memory_space<smem>>
    %c0_0 = arith.constant 0 : index
    %c0_1 = arith.constant 0 : index
    %1 = vector.load %arg2[%c0_0, %c0_1] : memref<56x1xf32, #tpu.memory_space<vmem>>, vector<56x1xf32>
    %c0_2 = arith.constant 0 : index
    %c0_3 = arith.constant 0 : index
    %2 = vector.load %arg3[%c0_2, %c0_3] : memref<56x128xf32, #tpu.memory_space<vmem>>, vector<56x128xf32>
    %3 = vector.broadcast %1 : vector<56x1xf32> to vector<56x128xf32>
    %4 = arith.subf %3, %2 : vector<56x128xf32>
    %5 = vector.broadcast %0 : f32 to vector<56x128xf32>
    %6 = arith.mulf %5, %4 : vector<56x128xf32>
    %7 = arith.mulf %6, %4 : vector<56x128xf32>
    %8 = tpu.iota {dimensions = array<i32: 1>} : vector<56x128xi32>
    %c50_i32 = arith.constant 50 : i32
    %9 = vector.broadcast %c50_i32 : i32 to vector<56x128xi32>
    %10 = arith.cmpi slt, %8, %9 : vector<56x128xi32>
    %cst = arith.constant -1.000000e+30 : f32
    %11 = vector.broadcast %cst : f32 to vector<56x128xf32>
    %12 = arith.select %10, %7, %11 : vector<56x128xi1>, vector<56x128xf32>
    %cst_4 = arith.constant dense<0xFF800000> : vector<56xf32>
    %13 = vector.multi_reduction <maximumf>, %12, %cst_4 [1] : vector<56x128xf32> to vector<56xf32>
    %14 = vector.shape_cast %13 : vector<56xf32> to vector<56x1xf32>
    %15 = vector.broadcast %14 : vector<56x1xf32> to vector<56x128xf32>
    %16 = arith.subf %12, %15 : vector<56x128xf32>
    %17 = math.exp %16 : vector<56x128xf32>
    %cst_5 = arith.constant dense<0.000000e+00> : vector<56xf32>
    %18 = vector.multi_reduction <add>, %17, %cst_5 [1] : vector<56x128xf32> to vector<56xf32>
    %19 = vector.shape_cast %18 : vector<56xf32> to vector<56x1xf32>
    %20 = tpu.reciprocal %19 {approx = true} : vector<56x1xf32> -> vector<56x1xf32>
    %21 = arith.mulf %19, %20 : vector<56x1xf32>
    %cst_6 = arith.constant 2.000000e+00 : f32
    %22 = vector.broadcast %cst_6 : f32 to vector<56x1xf32>
    %23 = arith.subf %22, %21 : vector<56x1xf32>
    %24 = arith.mulf %20, %23 : vector<56x1xf32>
    %c0_7 = arith.constant 0 : index
    %c0_8 = arith.constant 0 : index
    %25 = vector.load %arg4[%c0_7, %c0_8] : memref<56x128xf32, #tpu.memory_space<vmem>>, vector<56x128xf32>
    %26 = arith.mulf %17, %25 : vector<56x128xf32>
    %cst_9 = arith.constant dense<0.000000e+00> : vector<56xf32>
    %27 = vector.multi_reduction <add>, %26, %cst_9 [1] : vector<56x128xf32> to vector<56xf32>
    %28 = vector.shape_cast %27 : vector<56xf32> to vector<56x1xf32>
    %29 = arith.mulf %28, %24 : vector<56x1xf32>
    %c0_10 = arith.constant 0 : index
    %c0_11 = arith.constant 0 : index
    %30 = vector.load %arg5[%c0_10, %c0_11] : memref<56x1xf32, #tpu.memory_space<vmem>>, vector<56x1xf32>
    tpu.vector_store %arg5[%c0_10, %c0_11], %29 {strides = array<i32>} : memref<56x1xf32, #tpu.memory_space<vmem>>, vector<56x1xf32>,
    %31 = vector.broadcast %24 : vector<56x1xf32> to vector<56x128xf32>
    %32 = arith.mulf %17, %31 : vector<56x128xf32>
    %c0_12 = arith.constant 0 : index
    %c0_13 = arith.constant 0 : index
    %33 = vector.load %arg6[%c0_12, %c0_13] : memref<56x128xf32, #tpu.memory_space<vmem>>, vector<56x128xf32>
    tpu.vector_store %arg6[%c0_12, %c0_13], %32 {strides = array<i32>} : memref<56x128xf32, #tpu.memory_space<vmem>>, vector<56x128xf32>,
    return
  }
  func.func @transform_0(%arg0: i32) -> i32 {
    %c0_i32 = arith.constant 0 : i32
    %c0_i32_0 = arith.constant 0 : i32
    return %c0_i32 : i32
  }
  func.func @transform_1(%arg0: i32) -> (i32, i32) {
    %c0_i32 = arith.constant 0 : i32
    %c0_i32_0 = arith.constant 0 : i32
    return %arg0, %c0_i32 : i32, i32
  }
  func.func @transform_2(%arg0: i32) -> (i32, i32) {
    %c0_i32 = arith.constant 0 : i32
    %c0_i32_0 = arith.constant 0 : i32
    return %arg0, %c0_i32 : i32, i32
  }
  func.func @transform_3(%arg0: i32) -> (i32, i32) {
    %c0_i32 = arith.constant 0 : i32
    %c0_i32_0 = arith.constant 0 : i32
    return %arg0, %c0_i32 : i32, i32
  }
  func.func @transform_4(%arg0: i32) -> (i32, i32) {
    %c0_i32 = arith.constant 0 : i32
    %c0_i32_0 = arith.constant 0 : i32
    return %arg0, %c0_i32 : i32, i32
  }
  func.func @transform_5(%arg0: i32) -> (i32, i32) {
    %c0_i32 = arith.constant 0 : i32
    %c0_i32_0 = arith.constant 0 : i32
    return %arg0, %c0_i32 : i32, i32
  }
}

</mosaic_0001>

<llo_original>
// kernel: nw_kernel_regression.1
$region0: #{nw_kernel_regression.1}
  #allocation0 [shape = 'u32[]', space=smem, size = 0x4, offset = 0x4, fixed_abs, tag = 'smem constant byte address 0x4 - core index']
  #allocation1 [shape = 'u32[144,128]{1,0:T(1,128)}', space=vmem, size = 0x12000, scoped, tag = 'internal scratch']
  #allocation2 [shape = 'f32[1]{0:T(128)S(6)}', space=smem, size = 0x200, scoped, tag = 'scoped memory for nw_kernel_regression.1']
  %s0 = inlined_call_operand.<no memory space> [shape: f32[1], index: 0, kind: input, shape index: {}]
  %s1 = inlined_call_operand.vmem [shape: f32[56,1], index: 1, kind: input, shape index: {}]
  %s2 = inlined_call_operand.vmem [shape: f32[56,128], index: 2, kind: input, shape index: {}]
  %s3 = inlined_call_operand.vmem [shape: f32[56,128], index: 3, kind: input, shape index: {}]
  %s4 = inlined_call_operand.vmem [shape: f32[56,1], index: 4, kind: output, shape index: {0}]
  %s5 = inlined_call_operand.hbm [shape: f32[56,128], index: 5, kind: output, shape index: {1}]
  %6 = xla_tuple %s4, %s5
  %s7 = sld [smem:[#allocation0]]
  $region34: #{nw_kernel_regression.1} parent=0
    _
  %s9 = ssub.s32 1, %s7
  %s10 = scalar_select 0, %s9, %s7
  %11 = sst [smem:[#allocation2]] %s0
  $region1: #{nw_kernel_regression.1} parent=0
    #allocation3 [shape = 'u8[28672]{0}', space=vmem, size = 0x7000, scoped, tag = 'output window, operand 1, single buffered']
    #allocation4 [shape = 's32[1]{0}', space=sflag, size = 0x4, scoped, tag = 'scoped memory for nw_kernel_regression.1']
    %12 = vsyncpa [#allocation4], 0
    // Predicated region
    $region2: #{nw_kernel_regression.1} parent=1 // pred_check
      _
    $region3: #{nw_kernel_regression.1} parent=1 // pred_check_branch
      %14 = sbr.rel (0) target = $region5
    $region4: #{nw_kernel_regression.1} parent=1 // pred_region
      _
    $region5: #{nw_kernel_regression.1} parent=1 // pred_fallthru
      _
    // Predicated region
    $region6: #{nw_kernel_regression.1} parent=1 // pred_check
      _
    $region7: #{nw_kernel_regression.1} parent=1 // pred_check_branch
      %16 = sbr.rel (0) target = $region9
    $region8: #{nw_kernel_regression.1} parent=1 // pred_region
      _
    $region9: #{nw_kernel_regression.1} parent=1 // pred_fallthru
      _
    // Predicated region
    $region10: #{nw_kernel_regression.1} parent=1 // pred_check
      _
    $region11: #{nw_kernel_regression.1} parent=1 // pred_check_branch
      %18 = sbr.rel (0) target = $region13
    $region12: #{nw_kernel_regression.1} parent=1 // pred_region
      _
    $region13: #{nw_kernel_regression.1} parent=1 // pred_fallthru
      _
    // Predicated region
    $region14: #{nw_kernel_regression.1} parent=1 // pred_check
      _
    $region15: #{nw_kernel_regression.1} parent=1 // pred_check_branch
      %20 = sbr.rel (0) target = $region17
    $region16: #{nw_kernel_regression.1} parent=1 // pred_region
      _
    $region17: #{nw_kernel_regression.1} parent=1 // pred_fallthru
      _
    %s21 = sld [smem:[#allocation2]]
    %v22 = vld [vmem:[%s1] sm:$0xff]
    %v23 = vld [vmem:[%s1 + $0x8] sm:$0xff]
    %v24 = vld [vmem:[%s1 + $0x10] sm:$0xff]
    %v25 = vld [vmem:[%s1 + $0x18] sm:$0xff]
    %v26 = vld [vmem:[%s1 + $0x20] sm:$0xff]
    %v27 = vld [vmem:[%s1 + $0x28] sm:$0xff]
    %v28 = vld [vmem:[%s1 + $0x30] sm:$0xff]
    %v29 = vld [vmem:[%s2] sm:$0xff]
    %v30 = vld [vmem:[%s2 + $0x8] sm:$0xff]
    %v31 = vld [vmem:[%s2 + $0x10] sm:$0xff]
    %v32 = vld [vmem:[%s2 + $0x18] sm:$0xff]
    %v33 = vld [vmem:[%s2 + $0x20] sm:$0xff]
    %v34 = vld [vmem:[%s2 + $0x28] sm:$0xff]
    %v35 = vld [vmem:[%s2 + $0x30] sm:$0xff]
    %37 = vset.pattern.permute.xlu0 0
    %38 = vperm.xlu0 %37, %v22
    %v39 = vpop.permute.xlu0 %38
    %42 = vset.pattern.permute.xlu0 0
    %43 = vperm.xlu0 %42, %v23
    %v44 = vpop.permute.xlu0 %43
    %47 = vset.pattern.permute.xlu0 0
    %48 = vperm.xlu0 %47, %v24
    %v49 = vpop.permute.xlu0 %48
    %52 = vset.pattern.permute.xlu0 0
    %53 = vperm.xlu0 %52, %v25
    %v54 = vpop.permute.xlu0 %53
    %57 = vset.pattern.permute.xlu0 0
    %58 = vperm.xlu0 %57, %v26
    %v59 = vpop.permute.xlu0 %58
    %62 = vset.pattern.permute.xlu0 0
    %63 = vperm.xlu0 %62, %v27
    %v64 = vpop.permute.xlu0 %63
    %67 = vset.pattern.permute.xlu0 0
    %68 = vperm.xlu0 %67, %v28
    %v69 = vpop.permute.xlu0 %68
    %v71 = vsub.f32 %v39, %v29
    %v72 = vsub.f32 %v44, %v30
    %v73 = vsub.f32 %v49, %v31
    %v74 = vsub.f32 %v54, %v32
    %v75 = vsub.f32 %v59, %v33
    %v76 = vsub.f32 %v64, %v34
    %v77 = vsub.f32 %v69, %v35
    %v78 = vstv %s21
    %v79 = vmul.f32 %v78, %v71
    %v80 = vmul.f32 %v78, %v72
    %v81 = vmul.f32 %v78, %v73
    %v82 = vmul.f32 %v78, %v74
    %v83 = vmul.f32 %v78, %v75
    %v84 = vmul.f32 %v78, %v76
    %v85 = vmul.f32 %v78, %v77
    %v86 = vmul.f32 %v79, %v71
    %v87 = vmul.f32 %v80, %v72
    %v88 = vmul.f32 %v81, %v73
    %v89 = vmul.f32 %v82, %v74
    %v90 = vmul.f32 %v83, %v75
    %v91 = vmul.f32 %v84, %v76
    %v92 = vmul.f32 %v85, %v77
    %v93 = vlaneseq
    %v94 = vand.u32 %v93, 127
    %vm95 = vcmp.lt.s32.totalorder %v94, 50
    %v96 = vsel %vm95, %v86, -1e+30
    %v97 = vsel %vm95, %v87, -1e+30
    %v98 = vsel %vm95, %v88, -1e+30
    %v99 = vsel %vm95, %v89, -1e+30
    %v100 = vsel %vm95, %v90, -1e+30
    %v101 = vsel %vm95, %v91, -1e+30
    %v102 = vsel %vm95, %v92, -1e+30
    %103 = vmax.xlane.f32.xlu0 %v96
    %v104 = vpop.xlane.xlu0 %103
    %105 = vmax.xlane.f32.xlu0 %v97
    %v106 = vpop.xlane.xlu0 %105
    %107 = vmax.xlane.f32.xlu0 %v98
    %v108 = vpop.xlane.xlu0 %107
    %109 = vmax.xlane.f32.xlu0 %v99
    %v110 = vpop.xlane.xlu0 %109
    %111 = vmax.xlane.f32.xlu0 %v100
    %v112 = vpop.xlane.xlu0 %111
    %113 = vmax.xlane.f32.xlu0 %v101
    %v114 = vpop.xlane.xlu0 %113
    %115 = vmax.xlane.f32.xlu0 %v102
    %v116 = vpop.xlane.xlu0 %115
    %v117 = vsub.f32 %v96, %v104
    %v118 = vsub.f32 %v97, %v106
    %v119 = vsub.f32 %v98, %v108
    %v120 = vsub.f32 %v99, %v110
    %v121 = vsub.f32 %v100, %v112
    %v122 = vsub.f32 %v101, %v114
    %v123 = vsub.f32 %v102, %v116
    %v124 = vmul.f32 %v117, 1.442695
    %v125 = vpow.pop %v124
    %v126 = vmul.f32 %v118, 1.442695
    %v127 = vpow.pop %v126
    %v128 = vmul.f32 %v119, 1.442695
    %v129 = vpow.pop %v128
    %v130 = vmul.f32 %v120, 1.442695
    %v131 = vpow.pop %v130
    %v132 = vmul.f32 %v121, 1.442695
    %v133 = vpow.pop %v132
    %v134 = vmul.f32 %v122, 1.442695
    %v135 = vpow.pop %v134
    %v136 = vmul.f32 %v123, 1.442695
    %v137 = vpow.pop %v136
    %138 = vadd.xlane.f32.xlu0 %v125
    %v139 = vpop.xlane.xlu0 %138
    %140 = vadd.xlane.f32.xlu0 %v127
    %v141 = vpop.xlane.xlu0 %140
    %142 = vadd.xlane.f32.xlu0 %v129
    %v143 = vpop.xlane.xlu0 %142
    %144 = vadd.xlane.f32.xlu0 %v131
    %v145 = vpop.xlane.xlu0 %144
    %146 = vadd.xlane.f32.xlu0 %v133
    %v147 = vpop.xlane.xlu0 %146
    %148 = vadd.xlane.f32.xlu0 %v135
    %v149 = vpop.xlane.xlu0 %148
    %150 = vadd.xlane.f32.xlu0 %v137
    %v151 = vpop.xlane.xlu0 %150
    %v152 = vrcp.pop %v139
    %v153 = vrcp.pop %v141
    %v154 = vrcp.pop %v143
    %v155 = vrcp.pop %v145
    %v156 = vrcp.pop %v147
    %v157 = vrcp.pop %v149
    %v158 = vrcp.pop %v151
    %v159 = vmul.f32 %v139, %v152
    %v160 = vmul.f32 %v141, %v153
    %v161 = vmul.f32 %v143, %v154
    %v162 = vmul.f32 %v145, %v155
    %v163 = vmul.f32 %v147, %v156
    %v164 = vmul.f32 %v149, %v157
    %v165 = vmul.f32 %v151, %v158
    %v166 = vsub.f32 2.0, %v159
    %v167 = vsub.f32 2.0, %v160
    %v168 = vsub.f32 2.0, %v161
    %v169 = vsub.f32 2.0, %v162
    %v170 = vsub.f32 2.0, %v163
    %v171 = vsub.f32 2.0, %v164
    %v172 = vsub.f32 2.0, %v165
    %v173 = vmul.f32 %v152, %v166
    %v174 = vmul.f32 %v153, %v167
    %v175 = vmul.f32 %v154, %v168
    %v176 = vmul.f32 %v155, %v169
    %v177 = vmul.f32 %v156, %v170
    %v178 = vmul.f32 %v157, %v171
    %v179 = vmul.f32 %v158, %v172
    %v180 = vld [vmem:[%s3] sm:$0xff]
    %v181 = vld [vmem:[%s3 + $0x8] sm:$0xff]
    %v182 = vld [vmem:[%s3 + $0x10] sm:$0xff]
    %v183 = vld [vmem:[%s3 + $0x18] sm:$0xff]
    %v184 = vld [vmem:[%s3 + $0x20] sm:$0xff]
    %v185 = vld [vmem:[%s3 + $0x28] sm:$0xff]
    %v186 = vld [vmem:[%s3 + $0x30] sm:$0xff]
    %v187 = vmul.f32 %v125, %v180
    %v188 = vmul.f32 %v127, %v181
    %v189 = vmul.f32 %v129, %v182
    %v190 = vmul.f32 %v131, %v183
    %v191 = vmul.f32 %v133, %v184
    %v192 = vmul.f32 %v135, %v185
    %v193 = vmul.f32 %v137, %v186
    %194 = vadd.xlane.f32.xlu0 %v187
    %v195 = vpop.xlane.xlu0 %194
    %196 = vadd.xlane.f32.xlu0 %v188
    %v197 = vpop.xlane.xlu0 %196
    %198 = vadd.xlane.f32.xlu0 %v189
    %v199 = vpop.xlane.xlu0 %198
    %200 = vadd.xlane.f32.xlu0 %v190
    %v201 = vpop.xlane.xlu0 %200
    %202 = vadd.xlane.f32.xlu0 %v191
    %v203 = vpop.xlane.xlu0 %202
    %204 = vadd.xlane.f32.xlu0 %v192
    %v205 = vpop.xlane.xlu0 %204
    %206 = vadd.xlane.f32.xlu0 %v193
    %v207 = vpop.xlane.xlu0 %206
    %v208 = vmul.f32 %v195, %v173
    %v209 = vmul.f32 %v197, %v174
    %v210 = vmul.f32 %v199, %v175
    %v211 = vmul.f32 %v201, %v176
    %v212 = vmul.f32 %v203, %v177
    %v213 = vmul.f32 %v205, %v178
    %v214 = vmul.f32 %v207, %v179
    %vm215 = vcmask 7168
    %216 = vst.msk [vmem:[%s4] sm:$0xff] %vm215, %v208
    %217 = vst.msk [vmem:[%s4 + $0x8] sm:$0xff] %vm215, %v209
    %218 = vst.msk [vmem:[%s4 + $0x10] sm:$0xff] %vm215, %v210
    %219 = vst.msk [vmem:[%s4 + $0x18] sm:$0xff] %vm215, %v211
    %220 = vst.msk [vmem:[%s4 + $0x20] sm:$0xff] %vm215, %v212
    %221 = vst.msk [vmem:[%s4 + $0x28] sm:$0xff] %vm215, %v213
    %222 = vst.msk [vmem:[%s4 + $0x30] sm:$0xff] %vm215, %v214
    %v223 = vmul.f32 %v125, %v173
    %v224 = vmul.f32 %v127, %v174
    %v225 = vmul.f32 %v129, %v175
    %v226 = vmul.f32 %v131, %v176
    %v227 = vmul.f32 %v133, %v177
    %v228 = vmul.f32 %v135, %v178
    %v229 = vmul.f32 %v137, %v179
    %230 = vst [vmem:[#allocation3] sm:$0xff] %v223
    %231 = vst [vmem:[#allocation3 + $0x8] sm:$0xff] %v224
    %232 = vst [vmem:[#allocation3 + $0x10] sm:$0xff] %v225
    %233 = vst [vmem:[#allocation3 + $0x18] sm:$0xff] %v226
    %234 = vst [vmem:[#allocation3 + $0x20] sm:$0xff] %v227
    %235 = vst [vmem:[#allocation3 + $0x28] sm:$0xff] %v228
    %236 = vst [vmem:[#allocation3 + $0x30] sm:$0xff] %v229
    // Predicated region
    $region18: #{nw_kernel_regression.1} parent=1 // pred_check
      _
    $region19: #{nw_kernel_regression.1} parent=1 // pred_check_branch
      %238 = sbr.rel (0) target = $region21
    $region20: #{nw_kernel_regression.1} parent=1 // pred_region
      _
    $region21: #{nw_kernel_regression.1} parent=1 // pred_fallthru
      _
    // Predicated region
    $region22: #{nw_kernel_regression.1} parent=1 // pred_check
      _
    $region23: #{nw_kernel_regression.1} parent=1 // pred_check_branch
      %240 = sbr.rel (0) target = $region25
    $region24: #{nw_kernel_regression.1} parent=1 // pred_region
      %s242 = ssub.s32 896, 896
      %243 = vsyncadd [#allocation4], %s242
      %s244 = sshll.u32 [#allocation3], 4
      %s245 = int_to_ptr.vmem [resolvable:$true] %s244
      %250 = dma.vmem_to_hbm [thread:$0]  %s245, 896, %s5, [#allocation4], 128, 128, 8
    $region25: #{nw_kernel_regression.1} parent=1 // pred_fallthru
      _
    // Predicated region
    $region26: #{nw_kernel_regression.1} parent=1 // pred_check
      _
    $region27: #{nw_kernel_regression.1} parent=1 // pred_check_branch
      %252 = sbr.rel (0) target = $region29
    $region28: #{nw_kernel_regression.1} parent=1 // pred_region
      _
    $region29: #{nw_kernel_regression.1} parent=1 // pred_fallthru
      _
    // Predicated region
    $region30: #{nw_kernel_regression.1} parent=1 // pred_check
      _
    $region31: #{nw_kernel_regression.1} parent=1 // pred_check_branch
      %254 = sbr.rel (0) target = $region33
    $region32: #{nw_kernel_regression.1} parent=1 // pred_region
      %255 = dma.done [#allocation4], 896
    $region33: #{nw_kernel_regression.1} parent=1 // pred_fallthru
      _
    %256 = vsyncpa [#allocation4], 1

</llo_original>
